<compile_context>
chip_gen: v6e
topology: v6e:2x2x1
jax: 0.10.0
libtpu: 0.0.40
codegen_flags: <defaults>
</compile_context>

<pallas_src>
import jax
import jax.numpy as jnp
from jax.experimental import pallas as pl
from jax.experimental.pallas import tpu as pltpu

HIDDEN = 128
NUM_CLASSES = 2
OUT_PAD = 128          # lane-dense padded classifier width; real logits live in [:, :2]
BN_EPS = 1e-5


def _pass1_kernel(x_ref, w1_ref, h_ref, sum_ref, sq_ref):
    """h = x @ W1 (bf16 MXU, f32 acc); accumulate per-column sum and sum-of-squares."""
    @pl.when(pl.program_id(0) == 0)
    def _():
        sum_ref[...] = jnp.zeros_like(sum_ref)
        sq_ref[...] = jnp.zeros_like(sq_ref)

    h = jnp.dot(
        x_ref[...].astype(jnp.bfloat16),
        w1_ref[...],
        preferred_element_type=jnp.float32,
    )
    h_ref[...] = h
    # Zero-padded batch rows give h == 0 (no bias) -> no contribution to the stats.
    sum_ref[...] += jnp.sum(h, axis=0, keepdims=True)
    sq_ref[...] += jnp.sum(h * h, axis=0, keepdims=True)


def _pass2_kernel(h_ref, w2_ref, b2_ref, y_ref):
    """y = h @ W2' + b2' with BatchNorm already folded into (W2', b2'); lane-dense output."""
    y_ref[...] = (
        jnp.dot(h_ref[...], w2_ref[...], preferred_element_type=jnp.float32)
        + b2_ref[...]
    )


def cam_discriminator(x, w_feat, b_feat, gamma, beta, w_cls, b_cls, *, block_b=512):
    """x: (B, C) float32; weights in PyTorch (out, in) layout."""
    # b_feat cancels exactly under training-mode BatchNorm mean subtraction -> not used.
    del b_feat
    B, C = x.shape

    tb = min(block_b, ((B + 7) // 8) * 8)        # sublane-aligned batch tile
    nb = pl.cdiv(B, tb)
    b_pad = nb * tb
    if b_pad != B:
        x = jnp.pad(x, ((0, b_pad - B), (0, 0)))  # zero rows -> zero stats contribution

    w1 = w_feat.T.astype(jnp.bfloat16)            # (C, 128), bf16-native for the MXU

    # ---- Pass 1: matmul1 + BN batch statistics (accumulator pattern) ----
    h, s, sq = pl.pallas_call(
        _pass1_kernel,
        out_shape=(
            jax.ShapeDtypeStruct((b_pad, HIDDEN), jnp.float32),
            jax.ShapeDtypeStruct((1, HIDDEN), jnp.float32),
            jax.ShapeDtypeStruct((1, HIDDEN), jnp.float32),
        ),
        grid=(nb,),
        in_specs=[
            pl.BlockSpec((tb, C), lambda i: (i, 0)),
            pl.BlockSpec((C, HIDDEN), lambda i: (0, 0)),    # constant block -> VMEM-resident
        ],
        out_specs=(
            pl.BlockSpec((tb, HIDDEN), lambda i: (i, 0)),
            pl.BlockSpec((1, HIDDEN), lambda i: (0, 0)),    # sum accumulator
            pl.BlockSpec((1, HIDDEN), lambda i: (0, 0)),    # sum-of-squares accumulator
        ),
        compiler_params=pltpu.CompilerParams(
            dimension_semantics=("arbitrary",),             # accumulator axis is sequential
            vmem_limit_bytes=32 * 1024 * 1024,
        ),
    )(x, w1)

    # ---- Glue: BN stats over the true batch, fold BN + classifier, pad to 128 lanes ----
    mean = s / B
    var = sq / B - mean * mean                              # biased variance (training mode)
    scale = gamma.reshape(1, HIDDEN) * jax.lax.rsqrt(var + BN_EPS)
    shift = beta.reshape(1, HIDDEN) - mean * scale

    w2 = w_cls.T.astype(jnp.float32)                        # (128, 2)
    w2_eff = scale.reshape(HIDDEN, 1) * w2                  # (128, 2)
    b2_eff = shift @ w2 + b_cls.reshape(1, NUM_CLASSES)     # (1, 2)
    w2_pad = jnp.zeros((HIDDEN, OUT_PAD), jnp.float32).at[:, :NUM_CLASSES].set(w2_eff)
    b2_pad = jnp.zeros((1, OUT_PAD), jnp.float32).at[:, :NUM_CLASSES].set(b2_eff)

    # ---- Pass 2: normalize + classify, fully folded into one matmul + bias ----
    y = pl.pallas_call(
        _pass2_kernel,
        out_shape=jax.ShapeDtypeStruct((b_pad, OUT_PAD), jnp.float32),
        grid=(nb,),
        in_specs=[
            pl.BlockSpec((tb, HIDDEN), lambda i: (i, 0)),
            pl.BlockSpec((HIDDEN, OUT_PAD), lambda i: (0, 0)),
            pl.BlockSpec((1, OUT_PAD), lambda i: (0, 0)),
        ],
        out_specs=pl.BlockSpec((tb, OUT_PAD), lambda i: (i, 0)),
        compiler_params=pltpu.CompilerParams(
            dimension_semantics=("parallel",),              # megacore shard on v7x
            vmem_limit_bytes=32 * 1024 * 1024,
        ),
    )(h, w2_pad, b2_pad)

    return y[:B, :NUM_CLASSES]


def reference(x, w_feat, b_feat, gamma, beta, w_cls, b_cls):
    h = x @ w_feat.T + b_feat
    mean = jnp.mean(h, axis=0, keepdims=True)
    var = jnp.mean((h - mean) ** 2, axis=0, keepdims=True)
    h = (h - mean) / jnp.sqrt(var + BN_EPS)
    h = h * gamma + beta
    return h @ w_cls.T + b_cls


if __name__ == "__main__":
    def _check(B, C, block_b, key):
        kx, k1, k2, k3, k4 = jax.random.split(key, 5)
        x = jax.random.normal(kx, (B, C), dtype=jnp.float32)
        # Shapes match the module __init__ (weights in PyTorch (out, in) layout).
        w_feat = jax.random.normal(k1, (HIDDEN, C), dtype=jnp.float32) * 0.05
        b_feat = jax.random.normal(k2, (HIDDEN,), dtype=jnp.float32) * 0.05
        gamma = jnp.ones((HIDDEN,), dtype=jnp.float32)      # init.constant_(bn.weight, 1)
        beta = jnp.zeros((HIDDEN,), dtype=jnp.float32)      # init.constant_(bn.bias, 0)
        w_cls = jax.random.normal(k3, (NUM_CLASSES, HIDDEN), dtype=jnp.float32) * 0.05
        b_cls = jax.random.normal(k4, (NUM_CLASSES,), dtype=jnp.float32) * 0.05

        out = cam_discriminator(x, w_feat, b_feat, gamma, beta, w_cls, b_cls, block_b=block_b)
        out = jax.block_until_ready(out)
        ref = reference(x, w_feat, b_feat, gamma, beta, w_cls, b_cls)
        assert out.shape == (B, NUM_CLASSES)
        # Pass-1 matmul runs in bf16 on the MXU -> compare against the f32 reference with a
        # bf16-level tolerance (errors observed are ~1e-3; 2e-2 leaves ~10x margin).
        assert jnp.allclose(out, ref, atol=2e-2, rtol=2e-2), (out, ref)

    key = jax.random.PRNGKey(0)
    k_a, k_b = jax.random.split(key)
    _check(B=8, C=32, block_b=512, key=k_a)       # small single-tile path
    _check(B=200, C=256, block_b=64, key=k_b)     # multi-tile + batch-padding path
    print("KERNEL_OK")
</pallas_src>

<mosaic_0001>
module attributes {stable_mosaic.version = 11 : i64} {
  func.func @_pass1_kernel(%arg0: i32, %arg1: memref<8x32xf32, #tpu.memory_space<vmem>>, %arg2: memref<32x128xbf16, #tpu.memory_space<vmem>>, %arg3: memref<8x128xf32, #tpu.memory_space<vmem>>, %arg4: memref<1x128xf32, #tpu.memory_space<vmem>>, %arg5: memref<1x128xf32, #tpu.memory_space<vmem>>) attributes {dimension_semantics = [#tpu.dimension_semantics<arbitrary>], iteration_bounds = array<i64: 1>, scalar_prefetch = 0 : i64, scratch_operands = 0 : i64, tpu.core_type = #tpu.core_type<tc>, window_params = [{transform_indices = @transform_0, window_bounds = array<i64: 8, 32>}, {pipeline_mode = #tpu.pipeline_mode<synchronous>, transform_indices = @transform_1, window_bounds = array<i64: 32, 128>}, {transform_indices = @transform_2, window_bounds = array<i64: 8, 128>}, {pipeline_mode = #tpu.pipeline_mode<synchronous>, transform_indices = @transform_3, window_bounds = array<i64: 1, 128>}, {pipeline_mode = #tpu.pipeline_mode<synchronous>, transform_indices = @transform_4, window_bounds = array<i64: 1, 128>}]} {
    %c0_i32 = arith.constant 0 : i32
    %0 = arith.cmpi eq, %arg0, %c0_i32 : i32
    %1 = arith.extui %0 : i1 to i32
    %c0_i32_0 = arith.constant 0 : i32
    %2 = arith.cmpi ne, %1, %c0_i32_0 : i32
    scf.if %2 {
      %cst_16 = arith.constant 0.000000e+00 : f32
      %19 = vector.broadcast %cst_16 : f32 to vector<1x128xf32>
      %c0_17 = arith.constant 0 : index
      %c0_18 = arith.constant 0 : index
      %20 = vector.load %arg4[%c0_17, %c0_18] : memref<1x128xf32, #tpu.memory_space<vmem>>, vector<1x128xf32>
      tpu.vector_store %arg4[%c0_17, %c0_18], %19 {strides = array<i32>} : memref<1x128xf32, #tpu.memory_space<vmem>>, vector<1x128xf32>,
      %cst_19 = arith.constant 0.000000e+00 : f32
      %21 = vector.broadcast %cst_19 : f32 to vector<1x128xf32>
      %c0_20 = arith.constant 0 : index
      %c0_21 = arith.constant 0 : index
      %22 = vector.load %arg5[%c0_20, %c0_21] : memref<1x128xf32, #tpu.memory_space<vmem>>, vector<1x128xf32>
      tpu.vector_store %arg5[%c0_20, %c0_21], %21 {strides = array<i32>} : memref<1x128xf32, #tpu.memory_space<vmem>>, vector<1x128xf32>,
    } else {
    }
    %c0 = arith.constant 0 : index
    %c0_1 = arith.constant 0 : index
    %3 = vector.load %arg1[%c0, %c0_1] : memref<8x32xf32, #tpu.memory_space<vmem>>, vector<8x32xf32>
    %4 = arith.truncf %3 : vector<8x32xf32> to vector<8x32xbf16>
    %c0_2 = arith.constant 0 : index
    %c0_3 = arith.constant 0 : index
    %5 = vector.load %arg2[%c0_2, %c0_3] : memref<32x128xbf16, #tpu.memory_space<vmem>>, vector<32x128xbf16>
    %cst = arith.constant dense<0.000000e+00> : vector<8x128xf32>
    %6 = tpu.matmul %4, %5, %cst {dimension_numbers = #tpu.dot_dimension_numbers<[1], [0], [0], [1], [0, 0, 1, 1], [], []>} : vector<8x32xbf16>, vector<32x128xbf16>, vector<8x128xf32> -> vector<8x128xf32>
    %c0_4 = arith.constant 0 : index
    %c0_5 = arith.constant 0 : index
    %7 = vector.load %arg3[%c0_4, %c0_5] : memref<8x128xf32, #tpu.memory_space<vmem>>, vector<8x128xf32>
    tpu.vector_store %arg3[%c0_4, %c0_5], %6 {strides = array<i32>} : memref<8x128xf32, #tpu.memory_space<vmem>>, vector<8x128xf32>,
    %c0_6 = arith.constant 0 : index
    %c0_7 = arith.constant 0 : index
    %8 = vector.load %arg4[%c0_6, %c0_7] : memref<1x128xf32, #tpu.memory_space<vmem>>, vector<1x128xf32>
    %cst_8 = arith.constant dense<0.000000e+00> : vector<128xf32>
    %9 = vector.multi_reduction <add>, %6, %cst_8 [0] : vector<8x128xf32> to vector<128xf32>
    %10 = vector.shape_cast %9 : vector<128xf32> to vector<1x128xf32>
    %11 = arith.addf %8, %10 : vector<1x128xf32>
    %c0_9 = arith.constant 0 : index
    %c0_10 = arith.constant 0 : index
    %12 = vector.load %arg4[%c0_9, %c0_10] : memref<1x128xf32, #tpu.memory_space<vmem>>, vector<1x128xf32>
    tpu.vector_store %arg4[%c0_9, %c0_10], %11 {strides = array<i32>} : memref<1x128xf32, #tpu.memory_space<vmem>>, vector<1x128xf32>,
    %c0_11 = arith.constant 0 : index
    %c0_12 = arith.constant 0 : index
    %13 = vector.load %arg5[%c0_11, %c0_12] : memref<1x128xf32, #tpu.memory_space<vmem>>, vector<1x128xf32>
    %14 = arith.mulf %6, %6 : vector<8x128xf32>
    %cst_13 = arith.constant dense<0.000000e+00> : vector<128xf32>
    %15 = vector.multi_reduction <add>, %14, %cst_13 [0] : vector<8x128xf32> to vector<128xf32>
    %16 = vector.shape_cast %15 : vector<128xf32> to vector<1x128xf32>
    %17 = arith.addf %13, %16 : vector<1x128xf32>
    %c0_14 = arith.constant 0 : index
    %c0_15 = arith.constant 0 : index
    %18 = vector.load %arg5[%c0_14, %c0_15] : memref<1x128xf32, #tpu.memory_space<vmem>>, vector<1x128xf32>
    tpu.vector_store %arg5[%c0_14, %c0_15], %17 {strides = array<i32>} : memref<1x128xf32, #tpu.memory_space<vmem>>, vector<1x128xf32>,
    return
  }
  func.func @transform_0(%arg0: i32) -> (i32, i32) {
    %c0_i32 = arith.constant 0 : i32
    %c0_i32_0 = arith.constant 0 : i32
    return %arg0, %c0_i32 : i32, i32
  }
  func.func @transform_1(%arg0: i32) -> (i32, i32) {
    %c0_i32 = arith.constant 0 : i32
    %c0_i32_0 = arith.constant 0 : i32
    %c0_i32_1 = arith.constant 0 : i32
    return %c0_i32, %c0_i32_0 : i32, i32
  }
  func.func @transform_2(%arg0: i32) -> (i32, i32) {
    %c0_i32 = arith.constant 0 : i32
    %c0_i32_0 = arith.constant 0 : i32
    return %arg0, %c0_i32 : i32, i32
  }
  func.func @transform_3(%arg0: i32) -> (i32, i32) {
    %c0_i32 = arith.constant 0 : i32
    %c0_i32_0 = arith.constant 0 : i32
    %c0_i32_1 = arith.constant 0 : i32
    return %c0_i32, %c0_i32_0 : i32, i32
  }
  func.func @transform_4(%arg0: i32) -> (i32, i32) {
    %c0_i32 = arith.constant 0 : i32
    %c0_i32_0 = arith.constant 0 : i32
    %c0_i32_1 = arith.constant 0 : i32
    return %c0_i32, %c0_i32_0 : i32, i32
  }
}

</mosaic_0001>

<llo_original>
// kernel: tpu_custom_call.1
$region0: #{tpu_custom_call.1}
  #allocation0 [shape = 'u32[]', space=smem, size = 0x4, offset = 0x4, fixed_abs, tag = 'smem constant byte address 0x4 - core index']
  #allocation1 [shape = 'u32[144,128]{1,0:T(1,128)}', space=vmem, size = 0x12000, scoped, tag = 'internal scratch']
  %s0 = inlined_call_operand.hbm [shape: f32[8,32], index: 0, kind: input, shape index: {}]
  %s1 = inlined_call_operand.hbm [shape: bf16[32,128], index: 1, kind: input, shape index: {}]
  %s2 = inlined_call_operand.hbm [shape: f32[8,128], index: 2, kind: output, shape index: {0}]
  %s3 = inlined_call_operand.hbm [shape: f32[1,128], index: 3, kind: output, shape index: {1}]
  %s4 = inlined_call_operand.hbm [shape: f32[1,128], index: 4, kind: output, shape index: {2}]
  %5 = xla_tuple %s2, %s3, %s4
  %s6 = sld [smem:[#allocation0]]
  $region46: #{tpu_custom_call.1} parent=0
    _
  %s8 = ssub.s32 1, %s6
  %s9 = scalar_select 0, %s8, %s6
  $region1: #{tpu_custom_call.1} parent=0
    #allocation2 [shape = 'u8[4096]{0}', space=vmem, size = 0x1000, scoped, tag = 'input window, operand 0, single buffered']
    #allocation3 [shape = 's32[1]{0}', space=sflag, size = 0x4, scoped, tag = 'scoped memory for tpu_custom_call.1']
    #allocation4 [shape = 's32[1]{0}', space=sflag, size = 0x4, scoped, tag = 'scoped memory for tpu_custom_call.1']
    #allocation5 [shape = 'u8[8192]{0}', space=vmem, size = 0x2000, scoped, tag = 'input window, operand 1, single buffered']
    #allocation6 [shape = 's32[1]{0}', space=sflag, size = 0x4, scoped, tag = 'scoped memory for tpu_custom_call.1']
    #allocation7 [shape = 'u8[4096]{0}', space=vmem, size = 0x1000, scoped, tag = 'output window, operand 0, single buffered']
    #allocation8 [shape = 'u8[512]{0}', space=vmem, size = 0x400, scoped, tag = 'output window, operand 1, single buffered']
    #allocation9 [shape = 's32[1]{0}', space=sflag, size = 0x4, scoped, tag = 'scoped memory for tpu_custom_call.1']
    #allocation10 [shape = 'u8[512]{0}', space=vmem, size = 0x400, scoped, tag = 'output window, operand 2, single buffered']
    %10 = vsyncpa [#allocation3], 0
    %11 = vsyncpa [#allocation6], 0
    %12 = vsyncpa [#allocation4], 0
    %13 = vsyncpa [#allocation9], 0
    // Predicated region
    $region2: #{tpu_custom_call.1} parent=1 // pred_check
      _
    $region3: #{tpu_custom_call.1} parent=1 // pred_check_branch
      %15 = sbr.rel (0) target = $region5
    $region4: #{tpu_custom_call.1} parent=1 // pred_region
      %s17 = ssub.s32 128, 128
      %18 = vsyncadd [#allocation3], %s17
      %s20 = sshll.u32 [#allocation2], 4
      %s21 = int_to_ptr.vmem [resolvable:$true] %s20
      %23 = dma.hbm_to_vmem [thread:$0]  %s0, 128, %s21, [#allocation3]
    $region5: #{tpu_custom_call.1} parent=1 // pred_fallthru
      _
    // Predicated region
    $region6: #{tpu_custom_call.1} parent=1 // pred_check
      _
    $region7: #{tpu_custom_call.1} parent=1 // pred_check_branch
      %25 = sbr.rel (0) target = $region9
    $region8: #{tpu_custom_call.1} parent=1 // pred_region
      %s27 = ssub.s32 256, 256
      %28 = vsyncadd [#allocation6], %s27
      %s29 = sshll.u32 [#allocation5], 4
      %s30 = int_to_ptr.vmem [resolvable:$true] %s29
      %35 = dma.hbm_to_vmem [thread:$0]  %s1, 256, %s30, [#allocation6], 64, 64, 4
    $region9: #{tpu_custom_call.1} parent=1 // pred_fallthru
      _
    // Predicated region
    $region10: #{tpu_custom_call.1} parent=1 // pred_check
      _
    $region11: #{tpu_custom_call.1} parent=1 // pred_check_branch
      %37 = sbr.rel (0) target = $region13
    $region12: #{tpu_custom_call.1} parent=1 // pred_region
      %38 = dma.done [#allocation3], 128
    $region13: #{tpu_custom_call.1} parent=1 // pred_fallthru
      _
    // Predicated region
    $region14: #{tpu_custom_call.1} parent=1 // pred_check
      _
    $region15: #{tpu_custom_call.1} parent=1 // pred_check_branch
      %40 = sbr.rel (0) target = $region17
    $region16: #{tpu_custom_call.1} parent=1 // pred_region
      %41 = dma.done [#allocation6], 256
    $region17: #{tpu_custom_call.1} parent=1 // pred_fallthru
      _
    %p43 = scmp.eq.s32.totalorder 0, 0
    // Predicated region
    $region18: #{tpu_custom_call.1} parent=1 // pred_check
      %p44 = pneg %p43
    $region19: #{tpu_custom_call.1} parent=1 // pred_check_branch
      %46 = sbr.rel (%p44) target = $region21
    $region20: #{tpu_custom_call.1} parent=1 // pred_region
      %47 = vst [vmem:[#allocation8] sm:$0x1] 0.0
      %48 = vst [vmem:[#allocation10] sm:$0x1] 0.0
    $region21: #{tpu_custom_call.1} parent=1 // pred_fallthru
      _
    %v49 = vld [vmem:[#allocation2] sm:$0xff]
    %v50 = vpack.c.bf16 %v49, %v49
    %v51 = vld [vmem:[#allocation5] sm:$0xf]
    %v52 = vld [vmem:[#allocation5 + $0x4] sm:$0xf]
    %v53 = vld [vmem:[#allocation5 + $0x8] sm:$0xf]
    %v54 = vld [vmem:[#allocation5 + $0xc] sm:$0xf]
    %v59 = vunpack.c.l.b16 %v51
    %v60 = vunpack.c.l.b16 %v52
    %v61 = vunpack.c.l.b16 %v53
    %v62 = vunpack.c.l.b16 %v54
    %v63 = vpack.c.b16 %v60, %v59
    %v64 = vpack.c.b16 %v62, %v61
    %vm67 = vcmask 261120
    %v69 = vsel %vm67, %v50, 0
    %71 = vmatprep.subr.bf16.mxu0 0
    %72 = vmatpush1.bf16.msra.mxu0 0
    %73 = vmatprep.subr.bf16.mxu0 0
    %74 = vmatpush1.bf16.msra.mxu0 0
    %75 = vmatprep.subr.bf16.mxu0 0
    %76 = vmatpush1.bf16.msra.mxu0 0
    %77 = vmatprep.subr.bf16.mxu0 0
    %78 = vmatpush1.bf16.msra.mxu0 0
    %79 = vmatprep.subr.bf16.mxu0 0
    %80 = vmatpush1.bf16.msra.mxu0 0
    %81 = vmatprep.subr.bf16.mxu0 0
    %82 = vmatpush1.bf16.msra.mxu0 0
    %83 = vmatprep.subr.bf16.mxu0 0
    %84 = vmatpush1.bf16.msra.mxu0 %v64
    %85 = vmatprep.subr.bf16.mxu0 0
    %86 = vmatpush1.bf16.msra.mxu0 %v63
    %87 = vmatprep.subr.bf16.mxu0 0
    %88 = vmatpush2.bf16.msra.mxu0 0
    %89 = vmatprep.subr.bf16.mxu0 0
    %90 = vmatpush2.bf16.msra.mxu0 0
    %91 = vmatprep.subr.bf16.mxu0 0
    %92 = vmatpush2.bf16.msra.mxu0 0
    %93 = vmatprep.subr.bf16.mxu0 0
    %94 = vmatpush2.bf16.msra.mxu0 0
    %95 = vmatprep.subr.bf16.mxu0 0
    %96 = vmatpush2.bf16.msra.mxu0 0
    %97 = vmatprep.subr.bf16.mxu0 0
    %98 = vmatpush2.bf16.msra.mxu0 0
    %99 = vmatprep.subr.bf16.mxu0 0
    %100 = vmatpush2.bf16.msra.mxu0 0
    %101 = vmatprep.subr.bf16.mxu0 0
    %102 = vmatpush2.bf16.msra.mxu0 0
    %103 = vmatprep.mubr.bf16.mxu0 0
    %104 = vmatmul.mubr.bf16.gmra.mxu0 %v69
    %v105 = vpop.f32.mrf.mxu0
    %v106 = vadd.f32 0.0, %v105
    %v107 = vpop.f32.mrf.mxu0
    %v108 = vpop.f32.mrf.mxu0
    %v109 = vpop.f32.mrf.mxu0
    %110 = vdwg.mxu0
    %111 = vst [vmem:[#allocation7] sm:$0xff] %v106
    %v112 = vld [vmem:[#allocation8] sm:$0x1]
    %v113 = vrot.slane %v106, 4
    %v114 = vadd.f32 %v106, %v113
    %v115 = vrot.slane %v114, 2
    %v116 = vadd.f32 %v114, %v115
    %v117 = vrot.slane %v116, 1
    %v118 = vadd.f32 %v116, %v117
    %v119 = vadd.f32 %v112, %v118
    %120 = vst [vmem:[#allocation8] sm:$0x1] %v119
    %v121 = vld [vmem:[#allocation10] sm:$0x1]
    %v122 = vmul.f32 %v106, %v106
    %v123 = vrot.slane %v122, 4
    %v124 = vadd.f32 %v122, %v123
    %v125 = vrot.slane %v124, 2
    %v126 = vadd.f32 %v124, %v125
    %v127 = vrot.slane %v126, 1
    %v128 = vadd.f32 %v126, %v127
    %v129 = vadd.f32 %v121, %v128
    %130 = vst [vmem:[#allocation10] sm:$0x1] %v129
    // Predicated region
    $region22: #{tpu_custom_call.1} parent=1 // pred_check
      _
    $region23: #{tpu_custom_call.1} parent=1 // pred_check_branch
      %132 = sbr.rel (0) target = $region25
    $region24: #{tpu_custom_call.1} parent=1 // pred_region
      %s134 = ssub.s32 128, 128
      %135 = vsyncadd [#allocation4], %s134
      %s137 = sshll.u32 [#allocation7], 4
      %s138 = int_to_ptr.vmem [resolvable:$true] %s137
      %140 = dma.vmem_to_hbm [thread:$0]  %s138, 128, %s2, [#allocation4]
    $region25: #{tpu_custom_call.1} parent=1 // pred_fallthru
      _
    // Predicated region
    $region26: #{tpu_custom_call.1} parent=1 // pred_check
      _
    $region27: #{tpu_custom_call.1} parent=1 // pred_check_branch
      %142 = sbr.rel (0) target = $region29
    $region28: #{tpu_custom_call.1} parent=1 // pred_region
      %s144 = ssub.s32 16, 16
      %145 = vsyncadd [#allocation9], %s144
      %s147 = sshll.u32 [#allocation8], 4
      %s148 = int_to_ptr.vmem [resolvable:$true] %s147
      %150 = dma.vmem_to_hbm [thread:$0]  %s148, 16, %s3, [#allocation9]
    $region29: #{tpu_custom_call.1} parent=1 // pred_fallthru
      _
    // Predicated region
    $region30: #{tpu_custom_call.1} parent=1 // pred_check
      _
    $region31: #{tpu_custom_call.1} parent=1 // pred_check_branch
      %152 = sbr.rel (0) target = $region33
    $region32: #{tpu_custom_call.1} parent=1 // pred_region
      %s154 = ssub.s32 16, 16
      %155 = vsyncadd [#allocation9], %s154
      %s157 = sshll.u32 [#allocation10], 4
      %s158 = int_to_ptr.vmem [resolvable:$true] %s157
      %160 = dma.vmem_to_hbm [thread:$0]  %s158, 16, %s4, [#allocation9]
    $region33: #{tpu_custom_call.1} parent=1 // pred_fallthru
      _
    // Predicated region
    $region34: #{tpu_custom_call.1} parent=1 // pred_check
      _
    $region35: #{tpu_custom_call.1} parent=1 // pred_check_branch
      %162 = sbr.rel (0) target = $region37
    $region36: #{tpu_custom_call.1} parent=1 // pred_region
      %163 = dma.done [#allocation4], 128
    $region37: #{tpu_custom_call.1} parent=1 // pred_fallthru
      _
    // Predicated region
    $region38: #{tpu_custom_call.1} parent=1 // pred_check
      _
    $region39: #{tpu_custom_call.1} parent=1 // pred_check_branch
      %165 = sbr.rel (0) target = $region41
    $region40: #{tpu_custom_call.1} parent=1 // pred_region
      %166 = dma.done [#allocation9], 16
    $region41: #{tpu_custom_call.1} parent=1 // pred_fallthru
      _
    // Predicated region
    $region42: #{tpu_custom_call.1} parent=1 // pred_check
      _
    $region43: #{tpu_custom_call.1} parent=1 // pred_check_branch
      %168 = sbr.rel (0) target = $region45
    $region44: #{tpu_custom_call.1} parent=1 // pred_region
      %169 = dma.done [#allocation9], 16
    $region45: #{tpu_custom_call.1} parent=1 // pred_fallthru
      _
    %170 = vsyncpa [#allocation3], 1
    %171 = vsyncpa [#allocation6], 1
    %172 = vsyncpa [#allocation4], 1
    %173 = vsyncpa [#allocation9], 1

</llo_original>
